<compile_context>
chip_gen: v7x
topology: tpu7x:2x2x1
jax: 0.10.0
libtpu: 0.0.40
codegen_flags: <defaults>
</compile_context>

<pallas_src>
import functools

import jax
import jax.numpy as jnp
from jax.experimental import pallas as pl
from jax.experimental.pallas import tpu as pltpu

SZ = 9  # hidden width, matching the PyTorch module's `sz`


def _round_up(n, m):
    return ((n + m - 1) // m) * m


def mlp_kernel(x_ref, w_ref, v_ref, o_ref):
    # x_ref : (1, 1, TB)   batch-on-lanes input slab for this grid step
    # w_ref : (3, SZ, 8)   fc2..fc4 weights, first 8 input features (MXU operand)
    # v_ref : (SZ, 16)     packed vectors:
    #                      cols [w1, b1, b2, b3, b4, w5, b5, w2_c8, w3_c8, w4_c8, pad...]
    # o_ref : (1, 1, TB)   lane-dense output slab
    x = x_ref[0]                      # (1, TB)
    v = v_ref[...]                    # (SZ, 16)

    w1 = v[:, 0:1]                    # (SZ, 1)
    b1 = v[:, 1:2]
    b2 = v[:, 2:3]
    b3 = v[:, 3:4]
    b4 = v[:, 4:5]
    w5 = v[:, 5:6]                    # (SZ, 1)
    b5 = v[0:1, 6:7]                  # (1, 1)
    w2c = v[:, 7:8]                   # 9th input-feature column of fc2 weight
    w3c = v[:, 8:9]
    w4c = v[:, 9:10]

    # fc1: K=1 matmul == broadcast multiply. Activations are (SZ, TB):
    # features on sublanes, batch on the 128-lane axis (lane-dense throughout).
    h = jnp.maximum(w1 * x + b1, 0.0)                                       # (SZ, TB)

    def layer(w8, wc, b, h):
        # MXU dot over the first 8 features (single f32 sublane vreg -> one
        # vmatmul push per 128-lane group) + VPU rank-1 update for feature 9.
        y = jnp.dot(w8, h[:8, :], preferred_element_type=jnp.float32)       # (SZ, TB)
        y = y + wc * h[8:9, :] + b
        return jnp.maximum(y, 0.0)

    h = layer(w_ref[0], w2c, b2, h)   # fc2
    h = layer(w_ref[1], w3c, b3, h)   # fc3
    h = layer(w_ref[2], w4c, b4, h)   # fc4

    # fc5: N=1 output -> sublane reduce (XLU slot, has slack); stays lane-dense.
    out = jnp.sum(w5 * h, axis=0, keepdims=True) + b5                       # (1, TB)
    o_ref[0] = out


def pack_params(params):
    """Pack PyTorch-layout params ((out,in) weights, (out,) biases) into 2 arrays."""
    (w1, b1), (w2, b2), (w3, b3), (w4, b4), (w5, b5) = params
    # fc2..fc4: first 8 input-feature columns go to the MXU operand stack,
    # the 9th column goes into the packed-vector array (VPU rank-1 update).
    w_stack = jnp.stack(
        [w2[:, :8], w3[:, :8], w4[:, :8]], axis=0).astype(jnp.float32)      # (3, SZ, 8)
    b5_col = jnp.full((SZ,), jnp.reshape(b5, ()), jnp.float32)
    cols = [
        w1.reshape(SZ),                # fc1 weight (SZ, 1) -> column
        b1.reshape(SZ),
        b2.reshape(SZ),
        b3.reshape(SZ),
        b4.reshape(SZ),
        w5.reshape(SZ),                # fc5 weight (1, SZ) -> column
        b5_col,
        w2[:, 8],                      # 9th input-feature columns of fc2..fc4
        w3[:, 8],
        w4[:, 8],
    ]
    cols += [jnp.zeros((SZ,), jnp.float32)] * (16 - len(cols))
    vec_pack = jnp.stack(cols, axis=1).astype(jnp.float32)                  # (SZ, 16)
    return w_stack, vec_pack


@functools.partial(jax.jit, static_argnames=("block_rows",))
def net_forward(x, w_stack, vec_pack, block_rows=65536):
    B = x.shape[0]
    # Lane-dense batch tile: large enough that the ~0.35 us per-grid-step cost is
    # noise, capped at 64K so the 8x sublane-padded (1,TB) f32 slabs (in + out,
    # double-buffered ~ 8 MiB) fit comfortably in v7x's smaller VMEM, and sized
    # from B so the grid has >= 2 steps when the batch allows (v7x megacore).
    Bp128 = _round_up(max(B, 1), 128)
    TB = max(128, min(block_rows, _round_up(pl.cdiv(Bp128, 2), 128)))
    Bp = _round_up(B, TB)
    G = Bp // TB

    x_flat = x.reshape(B).astype(jnp.float32)
    if Bp != B:
        # Only a ragged tail needs padding; aligned batches skip this dispatch.
        x_flat = jnp.pad(x_flat, (0, Bp - B))
    x_3d = x_flat.reshape(G, 1, TB)            # (grid, 1, lanes)

    out = pl.pallas_call(
        mlp_kernel,
        out_shape=jax.ShapeDtypeStruct((G, 1, TB), jnp.float32),
        grid=(G,),
        in_specs=[
            pl.BlockSpec((1, 1, TB), lambda i: (i, 0, 0)),       # batch slab, pipelined (2-deep)
            pl.BlockSpec((3, SZ, 8), lambda i: (0, 0, 0)),       # weights, grid-resident
            pl.BlockSpec((SZ, 16), lambda i: (0, 0)),            # packed vectors, resident
        ],
        out_specs=pl.BlockSpec((1, 1, TB), lambda i: (i, 0, 0)),
        compiler_params=pltpu.CompilerParams(
            dimension_semantics=("parallel",)),                  # megacore on v7x
    )(x_3d, w_stack, vec_pack)

    out = out.reshape(Bp, 1)
    if Bp != B:
        out = out[:B]
    return out


def init_params(key):
    """Deterministic init mimicking PyTorch nn.Linear default (uniform +-1/sqrt(fan_in)).
    Weights kept in PyTorch layout: (out_features, in_features); biases (out_features,)."""
    def linear(k, fan_in, fan_out):
        kw, kb = jax.random.split(k)
        bound = 1.0 / jnp.sqrt(float(fan_in))
        w = jax.random.uniform(kw, (fan_out, fan_in), jnp.float32, -bound, bound)
        b = jax.random.uniform(kb, (fan_out,), jnp.float32, -bound, bound)
        return w, b

    ks = jax.random.split(key, 5)
    dims = [(1, SZ), (SZ, SZ), (SZ, SZ), (SZ, SZ), (SZ, 1)]
    return tuple(linear(k, fi, fo) for k, (fi, fo) in zip(ks, dims))


def reference_forward(x, params):
    h = x
    for i, (w, b) in enumerate(params):
        h = h @ w.T + b
        if i < len(params) - 1:
            h = jax.nn.relu(h)
    return h


if __name__ == "__main__":
    key = jax.random.PRNGKey(0)
    kp, kx1, kx2 = jax.random.split(key, 3)
    params = init_params(kp)
    w_stack, vec_pack = pack_params(params)

    # Small-shape example consistent with the module: batch of 8 scalar inputs.
    x = jax.random.normal(kx1, (8, 1), jnp.float32)
    out = net_forward(x, w_stack, vec_pack)
    jax.block_until_ready(out)

    ref = reference_forward(x, params)
    assert out.shape == (8, 1), out.shape
    # 5e-3 tolerance: MXU f32 dots use bf16-class multiply precision by default.
    assert jnp.allclose(out, ref, atol=5e-3, rtol=5e-3), (out, ref)

    # Larger, non-multiple batch to exercise the multi-step grid + padding path.
    x_big = jax.random.normal(kx2, (1500, 1), jnp.float32)
    out_big = net_forward(x_big, w_stack, vec_pack)
    jax.block_until_ready(out_big)
    ref_big = reference_forward(x_big, params)
    assert out_big.shape == (1500, 1), out_big.shape
    assert jnp.allclose(out_big, ref_big, atol=5e-3, rtol=5e-3)

    print("KERNEL_OK")
</pallas_src>

<mosaic_0001>
module attributes {stable_mosaic.version = 11 : i64} {
  func.func @mlp_kernel(%arg0: i32, %arg1: memref<1x1x128xf32, #tpu.memory_space<vmem>>, %arg2: memref<3x9x8xf32, #tpu.memory_space<vmem>>, %arg3: memref<9x16xf32, #tpu.memory_space<vmem>>, %arg4: memref<1x1x128xf32, #tpu.memory_space<vmem>>) attributes {dimension_semantics = [#tpu.dimension_semantics<parallel>], iteration_bounds = array<i64: 1>, scalar_prefetch = 0 : i64, scratch_operands = 0 : i64, tpu.core_type = #tpu.core_type<tc>, window_params = [{transform_indices = @transform_0, window_bounds = array<i64: 1, 1, 128>}, {pipeline_mode = #tpu.pipeline_mode<synchronous>, transform_indices = @transform_1, window_bounds = array<i64: 3, 9, 8>}, {pipeline_mode = #tpu.pipeline_mode<synchronous>, transform_indices = @transform_2, window_bounds = array<i64: 9, 16>}, {transform_indices = @transform_3, window_bounds = array<i64: 1, 1, 128>}]} {
    %c0 = arith.constant 0 : index
    %c0_0 = arith.constant 0 : index
    %c0_1 = arith.constant 0 : index
    %0 = vector.load %arg1[%c0, %c0_0, %c0_1] : memref<1x1x128xf32, #tpu.memory_space<vmem>>, vector<1x1x128xf32>
    %1 = vector.shape_cast %0 : vector<1x1x128xf32> to vector<1x128xf32>
    %c0_2 = arith.constant 0 : index
    %c0_3 = arith.constant 0 : index
    %2 = vector.load %arg3[%c0_2, %c0_3] : memref<9x16xf32, #tpu.memory_space<vmem>>, vector<9x16xf32>
    %3 = vector.extract_strided_slice %2 {offsets = [0, 0], sizes = [9, 1], strides = [1, 1]} : vector<9x16xf32> to vector<9x1xf32>
    %4 = vector.extract_strided_slice %2 {offsets = [0, 1], sizes = [9, 1], strides = [1, 1]} : vector<9x16xf32> to vector<9x1xf32>
    %5 = vector.extract_strided_slice %2 {offsets = [0, 2], sizes = [9, 1], strides = [1, 1]} : vector<9x16xf32> to vector<9x1xf32>
    %6 = vector.extract_strided_slice %2 {offsets = [0, 3], sizes = [9, 1], strides = [1, 1]} : vector<9x16xf32> to vector<9x1xf32>
    %7 = vector.extract_strided_slice %2 {offsets = [0, 4], sizes = [9, 1], strides = [1, 1]} : vector<9x16xf32> to vector<9x1xf32>
    %8 = vector.extract_strided_slice %2 {offsets = [0, 5], sizes = [9, 1], strides = [1, 1]} : vector<9x16xf32> to vector<9x1xf32>
    %9 = vector.extract_strided_slice %2 {offsets = [0, 6], sizes = [1, 1], strides = [1, 1]} : vector<9x16xf32> to vector<1x1xf32>
    %10 = vector.extract_strided_slice %2 {offsets = [0, 7], sizes = [9, 1], strides = [1, 1]} : vector<9x16xf32> to vector<9x1xf32>
    %11 = vector.extract_strided_slice %2 {offsets = [0, 8], sizes = [9, 1], strides = [1, 1]} : vector<9x16xf32> to vector<9x1xf32>
    %12 = vector.extract_strided_slice %2 {offsets = [0, 9], sizes = [9, 1], strides = [1, 1]} : vector<9x16xf32> to vector<9x1xf32>
    %13 = vector.broadcast %3 : vector<9x1xf32> to vector<9x128xf32>
    %14 = vector.broadcast %1 : vector<1x128xf32> to vector<9x128xf32>
    %15 = arith.mulf %13, %14 : vector<9x128xf32>
    %16 = vector.broadcast %4 : vector<9x1xf32> to vector<9x128xf32>
    %17 = arith.addf %15, %16 : vector<9x128xf32>
    %cst = arith.constant 0.000000e+00 : f32
    %18 = vector.broadcast %cst : f32 to vector<9x128xf32>
    %19 = arith.maximumf %17, %18 : vector<9x128xf32>
    %c0_4 = arith.constant 0 : index
    %c0_5 = arith.constant 0 : index
    %c0_6 = arith.constant 0 : index
    %20 = vector.load %arg2[%c0_4, %c0_5, %c0_6] : memref<3x9x8xf32, #tpu.memory_space<vmem>>, vector<1x9x8xf32>
    %21 = vector.shape_cast %20 : vector<1x9x8xf32> to vector<9x8xf32>
    %22 = vector.extract_strided_slice %19 {offsets = [0, 0], sizes = [8, 128], strides = [1, 1]} : vector<9x128xf32> to vector<8x128xf32>
    %cst_7 = arith.constant dense<0.000000e+00> : vector<9x128xf32>
    %23 = tpu.matmul %21, %22, %cst_7 {dimension_numbers = #tpu.dot_dimension_numbers<[1], [0], [0], [1], [0, 0, 1, 1], [], []>} : vector<9x8xf32>, vector<8x128xf32>, vector<9x128xf32> -> vector<9x128xf32>
    %24 = vector.extract_strided_slice %19 {offsets = [8, 0], sizes = [1, 128], strides = [1, 1]} : vector<9x128xf32> to vector<1x128xf32>
    %25 = vector.broadcast %10 : vector<9x1xf32> to vector<9x128xf32>
    %26 = vector.broadcast %24 : vector<1x128xf32> to vector<9x128xf32>
    %27 = arith.mulf %25, %26 : vector<9x128xf32>
    %28 = arith.addf %23, %27 : vector<9x128xf32>
    %29 = vector.broadcast %5 : vector<9x1xf32> to vector<9x128xf32>
    %30 = arith.addf %28, %29 : vector<9x128xf32>
    %cst_8 = arith.constant 0.000000e+00 : f32
    %31 = vector.broadcast %cst_8 : f32 to vector<9x128xf32>
    %32 = arith.maximumf %30, %31 : vector<9x128xf32>
    %c1 = arith.constant 1 : index
    %c0_9 = arith.constant 0 : index
    %c0_10 = arith.constant 0 : index
    %33 = vector.load %arg2[%c1, %c0_9, %c0_10] : memref<3x9x8xf32, #tpu.memory_space<vmem>>, vector<1x9x8xf32>
    %34 = vector.shape_cast %33 : vector<1x9x8xf32> to vector<9x8xf32>
    %35 = vector.extract_strided_slice %32 {offsets = [0, 0], sizes = [8, 128], strides = [1, 1]} : vector<9x128xf32> to vector<8x128xf32>
    %cst_11 = arith.constant dense<0.000000e+00> : vector<9x128xf32>
    %36 = tpu.matmul %34, %35, %cst_11 {dimension_numbers = #tpu.dot_dimension_numbers<[1], [0], [0], [1], [0, 0, 1, 1], [], []>} : vector<9x8xf32>, vector<8x128xf32>, vector<9x128xf32> -> vector<9x128xf32>
    %37 = vector.extract_strided_slice %32 {offsets = [8, 0], sizes = [1, 128], strides = [1, 1]} : vector<9x128xf32> to vector<1x128xf32>
    %38 = vector.broadcast %11 : vector<9x1xf32> to vector<9x128xf32>
    %39 = vector.broadcast %37 : vector<1x128xf32> to vector<9x128xf32>
    %40 = arith.mulf %38, %39 : vector<9x128xf32>
    %41 = arith.addf %36, %40 : vector<9x128xf32>
    %42 = vector.broadcast %6 : vector<9x1xf32> to vector<9x128xf32>
    %43 = arith.addf %41, %42 : vector<9x128xf32>
    %cst_12 = arith.constant 0.000000e+00 : f32
    %44 = vector.broadcast %cst_12 : f32 to vector<9x128xf32>
    %45 = arith.maximumf %43, %44 : vector<9x128xf32>
    %c2 = arith.constant 2 : index
    %c0_13 = arith.constant 0 : index
    %c0_14 = arith.constant 0 : index
    %46 = vector.load %arg2[%c2, %c0_13, %c0_14] : memref<3x9x8xf32, #tpu.memory_space<vmem>>, vector<1x9x8xf32>
    %47 = vector.shape_cast %46 : vector<1x9x8xf32> to vector<9x8xf32>
    %48 = vector.extract_strided_slice %45 {offsets = [0, 0], sizes = [8, 128], strides = [1, 1]} : vector<9x128xf32> to vector<8x128xf32>
    %cst_15 = arith.constant dense<0.000000e+00> : vector<9x128xf32>
    %49 = tpu.matmul %47, %48, %cst_15 {dimension_numbers = #tpu.dot_dimension_numbers<[1], [0], [0], [1], [0, 0, 1, 1], [], []>} : vector<9x8xf32>, vector<8x128xf32>, vector<9x128xf32> -> vector<9x128xf32>
    %50 = vector.extract_strided_slice %45 {offsets = [8, 0], sizes = [1, 128], strides = [1, 1]} : vector<9x128xf32> to vector<1x128xf32>
    %51 = vector.broadcast %12 : vector<9x1xf32> to vector<9x128xf32>
    %52 = vector.broadcast %50 : vector<1x128xf32> to vector<9x128xf32>
    %53 = arith.mulf %51, %52 : vector<9x128xf32>
    %54 = arith.addf %49, %53 : vector<9x128xf32>
    %55 = vector.broadcast %7 : vector<9x1xf32> to vector<9x128xf32>
    %56 = arith.addf %54, %55 : vector<9x128xf32>
    %cst_16 = arith.constant 0.000000e+00 : f32
    %57 = vector.broadcast %cst_16 : f32 to vector<9x128xf32>
    %58 = arith.maximumf %56, %57 : vector<9x128xf32>
    %59 = vector.broadcast %8 : vector<9x1xf32> to vector<9x128xf32>
    %60 = arith.mulf %59, %58 : vector<9x128xf32>
    %cst_17 = arith.constant dense<0.000000e+00> : vector<128xf32>
    %61 = vector.multi_reduction <add>, %60, %cst_17 [0] : vector<9x128xf32> to vector<128xf32>
    %62 = vector.shape_cast %61 : vector<128xf32> to vector<1x128xf32>
    %63 = vector.broadcast %9 : vector<1x1xf32> to vector<1x128xf32>
    %64 = arith.addf %62, %63 : vector<1x128xf32>
    %c0_18 = arith.constant 0 : index
    %c0_19 = arith.constant 0 : index
    %c0_20 = arith.constant 0 : index
    %65 = vector.load %arg4[%c0_18, %c0_19, %c0_20] : memref<1x1x128xf32, #tpu.memory_space<vmem>>, vector<1x1x128xf32>
    %66 = vector.shape_cast %65 : vector<1x1x128xf32> to vector<1x128xf32>
    %67 = vector.shape_cast %64 : vector<1x128xf32> to vector<1x1x128xf32>
    tpu.vector_store %arg4[%c0_18, %c0_19, %c0_20], %67 {strides = array<i32>} : memref<1x1x128xf32, #tpu.memory_space<vmem>>, vector<1x1x128xf32>,
    return
  }
  func.func @transform_0(%arg0: i32) -> (i32, i32, i32) {
    %c0_i32 = arith.constant 0 : i32
    %c0_i32_0 = arith.constant 0 : i32
    %c0_i32_1 = arith.constant 0 : i32
    return %arg0, %c0_i32, %c0_i32_0 : i32, i32, i32
  }
  func.func @transform_1(%arg0: i32) -> (i32, i32, i32) {
    %c0_i32 = arith.constant 0 : i32
    %c0_i32_0 = arith.constant 0 : i32
    %c0_i32_1 = arith.constant 0 : i32
    %c0_i32_2 = arith.constant 0 : i32
    return %c0_i32, %c0_i32_0, %c0_i32_1 : i32, i32, i32
  }
  func.func @transform_2(%arg0: i32) -> (i32, i32) {
    %c0_i32 = arith.constant 0 : i32
    %c0_i32_0 = arith.constant 0 : i32
    %c0_i32_1 = arith.constant 0 : i32
    return %c0_i32, %c0_i32_0 : i32, i32
  }
  func.func @transform_3(%arg0: i32) -> (i32, i32, i32) {
    %c0_i32 = arith.constant 0 : i32
    %c0_i32_0 = arith.constant 0 : i32
    %c0_i32_1 = arith.constant 0 : i32
    return %arg0, %c0_i32, %c0_i32_0 : i32, i32, i32
  }
}

</mosaic_0001>

<llo_original>
// kernel: net_forward.1
$region0: #{net_forward.1}
  #allocation0 [shape = 'u32[]', space=smem, size = 0x4, offset = 0x4, fixed_abs, tag = 'smem constant byte address 0x4 - core index']
  #allocation1 [shape = 'u32[144,128]{1,0:T(1,128)}', space=vmem, size = 0x12000, scoped, tag = 'internal scratch']
  %s0 = inlined_call_operand.vmem [shape: f32[1,1,128], index: 0, kind: input, shape index: {}]
  %s1 = inlined_call_operand.vmem [shape: f32[3,9,8], index: 1, kind: input, shape index: {}]
  %s2 = inlined_call_operand.vmem [shape: f32[9,16], index: 2, kind: input, shape index: {}]
  %s3 = inlined_call_operand.vmem [shape: f32[1,1,128], index: 3, kind: output, shape index: {}]
  %s4 = sld [smem:[#allocation0]]
  $region22: #{net_forward.1} parent=0
    _
  %s6 = ssub.s32 1, %s4
  %s7 = scalar_select 0, %s6, %s4
  // Predicated region
  $region2: #{net_forward.1} parent=0 // pred_check
    _
  $region3: #{net_forward.1} parent=0 // pred_check_branch
    %9 = sbr.rel (0) target = $region5
  $region4: #{net_forward.1} parent=0 // pred_region
    _
  $region5: #{net_forward.1} parent=0 // pred_fallthru
    _
  // Predicated region
  $region6: #{net_forward.1} parent=0 // pred_check
    _
  $region7: #{net_forward.1} parent=0 // pred_check_branch
    %11 = sbr.rel (0) target = $region9
  $region8: #{net_forward.1} parent=0 // pred_region
    _
  $region9: #{net_forward.1} parent=0 // pred_fallthru
    _
  // Predicated region
  $region10: #{net_forward.1} parent=0 // pred_check
    _
  $region11: #{net_forward.1} parent=0 // pred_check_branch
    %13 = sbr.rel (0) target = $region13
  $region12: #{net_forward.1} parent=0 // pred_region
    _
  $region13: #{net_forward.1} parent=0 // pred_fallthru
    _
  %v14 = vld [vmem:[%s0] sm:$0x1]
  %v15 = vld [vmem:[%s2] sm:$0xff]
  %v16 = vld [vmem:[%s2 + $0x8] sm:$0x1]
  %18 = vset.pattern.permute.xlu0 0
  %19 = vperm.xlu0 %18, %v15
  %v20 = vpop.permute.xlu0 %19
  %23 = vset.pattern.permute.xlu0 0
  %24 = vperm.xlu0 %23, %v16
  %v25 = vpop.permute.xlu0 %24
  %v28 = vlaneseq
  %v29 = vshrl.u32 %v28, 7
  %v30 = vsub.s32 0, %v29
  %v31 = vrot.slane %v14, %v30
  %v33 = vmul.f32 %v20, %v31
  %v34 = vmul.f32 %v25, %v31
  %35 = vset.pattern.permute.xlu0 1
  %36 = vperm.xlu0 %35, %v15
  %v37 = vpop.permute.xlu0 %36
  %39 = vset.pattern.permute.xlu0 1
  %40 = vperm.xlu0 %39, %v16
  %v41 = vpop.permute.xlu0 %40
  %v43 = vadd.f32 %v33, %v37
  %v44 = vadd.f32 %v34, %v41
  %v45 = vmax.f32 %v43, 0.0
  %v46 = vmax.f32 %v44, 0.0
  %v47 = vld [vmem:[%s1] sm:$0xff]
  %v48 = vld [vmem:[%s1 + $0x8] sm:$0x1]
  %49 = vset.pattern.permute.xlu0 7
  %50 = vperm.xlu0 %49, %v15
  %v51 = vpop.permute.xlu0 %50
  %53 = vset.pattern.permute.xlu0 7
  %54 = vperm.xlu0 %53, %v16
  %v55 = vpop.permute.xlu0 %54
  %v57 = vlaneseq
  %v58 = vshrl.u32 %v57, 7
  %v59 = vsub.s32 0, %v58
  %v60 = vrot.slane %v46, %v59
  %v61 = vmul.f32 %v51, %v60
  %v62 = vmul.f32 %v55, %v60
  %vm63 = vcmask 64512
  %v65 = vsel %vm63, %v47, 0
  %v68 = vsel %vm63, %v48, 0
  %70 = vmatprep.subr.mxu0 0.0
  %71 = vmatpush1.msra.mxu0 %v45
  %72 = vmatprep.subr.mxu0 0.0
  %73 = vmatpush1.msra.mxu0 0.0
  %74 = vmatprep.subr.mxu0 0.0
  %75 = vmatpush1.msra.mxu0 0.0
  %76 = vmatprep.subr.mxu0 0.0
  %77 = vmatpush1.msra.mxu0 0.0
  %78 = vmatprep.subr.mxu0 0.0
  %79 = vmatpush1.msra.mxu0 0.0
  %80 = vmatprep.subr.mxu0 0.0
  %81 = vmatpush1.msra.mxu0 0.0
  %82 = vmatprep.subr.mxu0 0.0
  %83 = vmatpush1.msra.mxu0 0.0
  %84 = vmatprep.subr.mxu0 0.0
  %85 = vmatpush1.msra.mxu0 0.0
  %86 = vmatprep.subr.mxu0 0.0
  %87 = vmatpush1.msra.mxu0 0.0
  %88 = vmatprep.subr.mxu0 0.0
  %89 = vmatpush1.msra.mxu0 0.0
  %90 = vmatprep.subr.mxu0 0.0
  %91 = vmatpush1.msra.mxu0 0.0
  %92 = vmatprep.subr.mxu0 0.0
  %93 = vmatpush1.msra.mxu0 0.0
  %94 = vmatprep.subr.mxu0 0.0
  %95 = vmatpush1.msra.mxu0 0.0
  %96 = vmatprep.subr.mxu0 0.0
  %97 = vmatpush1.msra.mxu0 0.0
  %98 = vmatprep.subr.mxu0 0.0
  %99 = vmatpush1.msra.mxu0 0.0
  %100 = vmatprep.subr.mxu0 0.0
  %101 = vmatpush1.msra.mxu0 0.0
  %102 = vmatprep.subr.mxu0 0.0
  %103 = vmatpush1.msra.mxu0 0.0
  %104 = vmatprep.subr.mxu0 0.0
  %105 = vmatpush1.msra.mxu0 0.0
  %106 = vmatprep.subr.mxu0 0.0
  %107 = vmatpush1.msra.mxu0 0.0
  %108 = vmatprep.subr.mxu0 0.0
  %109 = vmatpush1.msra.mxu0 0.0
  %110 = vmatprep.subr.mxu0 0.0
  %111 = vmatpush1.msra.mxu0 0.0
  %112 = vmatprep.subr.mxu0 0.0
  %113 = vmatpush1.msra.mxu0 0.0
  %114 = vmatprep.subr.mxu0 0.0
  %115 = vmatpush1.msra.mxu0 0.0
  %116 = vmatprep.subr.mxu0 0.0
  %117 = vmatpush1.msra.mxu0 0.0
  %118 = vmatprep.subr.mxu0 0.0
  %119 = vmatpush1.msra.mxu0 0.0
  %120 = vmatprep.subr.mxu0 0.0
  %121 = vmatpush1.msra.mxu0 0.0
  %122 = vmatprep.subr.mxu0 0.0
  %123 = vmatpush1.msra.mxu0 0.0
  %124 = vmatprep.subr.mxu0 0.0
  %125 = vmatpush1.msra.mxu0 0.0
  %126 = vmatprep.subr.mxu0 0.0
  %127 = vmatpush1.msra.mxu0 0.0
  %128 = vmatprep.subr.mxu0 0.0
  %129 = vmatpush1.msra.mxu0 0.0
  %130 = vmatprep.subr.mxu0 0.0
  %131 = vmatpush1.msra.mxu0 0.0
  %132 = vmatprep.subr.mxu0 0.0
  %133 = vmatpush1.msra.mxu0 0.0
  %134 = vmatprep.mubr.f32.mxu0 0.0
  %135 = vmatmul.mubr.f32.gmra.mrb[0].mxu0 %v65
  %v136 = vpop.f32.mrb[0].mxu0
  %v137 = vadd.f32 %v61, %v136
  %v138 = vpop.f32.mrb[0].mxu0
  %139 = vmatprep.mubr.f32.mxu0 0.0
  %140 = vmatmul.mubr.f32.gmra.mrb[0].mxu0 %v68
  %v141 = vpop.f32.mrb[0].mxu0
  %v142 = vadd.f32 %v62, %v141
  %v143 = vpop.f32.mrb[0].mxu0
  %144 = vdwg.mxu0
  %145 = vset.pattern.permute.xlu0 2
  %146 = vperm.xlu0 %145, %v15
  %v147 = vpop.permute.xlu0 %146
  %149 = vset.pattern.permute.xlu0 2
  %150 = vperm.xlu0 %149, %v16
  %v151 = vpop.permute.xlu0 %150
  %v153 = vadd.f32 %v137, %v147
  %v154 = vadd.f32 %v142, %v151
  %v155 = vmax.f32 %v153, 0.0
  %v156 = vmax.f32 %v154, 0.0
  %s157 = scalar_lea.vmem %s1, 16
  %v158 = vld [vmem:[%s157] sm:$0xff]
  %v159 = vld [vmem:[%s157 + $0x8] sm:$0x1]
  %160 = vset.pattern.permute.xlu0 8
  %161 = vperm.xlu0 %160, %v15
  %v162 = vpop.permute.xlu0 %161
  %164 = vset.pattern.permute.xlu0 8
  %165 = vperm.xlu0 %164, %v16
  %v166 = vpop.permute.xlu0 %165
  %v168 = vlaneseq
  %v169 = vshrl.u32 %v168, 7
  %v170 = vsub.s32 0, %v169
  %v171 = vrot.slane %v156, %v170
  %v172 = vmul.f32 %v162, %v171
  %v173 = vmul.f32 %v166, %v171
  %v175 = vsel %vm63, %v158, 0
  %v178 = vsel %vm63, %v159, 0
  %180 = vmatprep.subr.mxu0 0.0
  %181 = vmatpush1.msra.mxu0 %v155
  %182 = vmatprep.subr.mxu0 0.0
  %183 = vmatpush1.msra.mxu0 0.0
  %184 = vmatprep.subr.mxu0 0.0
  %185 = vmatpush1.msra.mxu0 0.0
  %186 = vmatprep.subr.mxu0 0.0
  %187 = vmatpush1.msra.mxu0 0.0
  %188 = vmatprep.subr.mxu0 0.0
  %189 = vmatpush1.msra.mxu0 0.0
  %190 = vmatprep.subr.mxu0 0.0
  %191 = vmatpush1.msra.mxu0 0.0
  %192 = vmatprep.subr.mxu0 0.0
  %193 = vmatpush1.msra.mxu0 0.0
  %194 = vmatprep.subr.mxu0 0.0
  %195 = vmatpush1.msra.mxu0 0.0
  %196 = vmatprep.subr.mxu0 0.0
  %197 = vmatpush1.msra.mxu0 0.0
  %198 = vmatprep.subr.mxu0 0.0
  %199 = vmatpush1.msra.mxu0 0.0
  %200 = vmatprep.subr.mxu0 0.0
  %201 = vmatpush1.msra.mxu0 0.0
  %202 = vmatprep.subr.mxu0 0.0
  %203 = vmatpush1.msra.mxu0 0.0
  %204 = vmatprep.subr.mxu0 0.0
  %205 = vmatpush1.msra.mxu0 0.0
  %206 = vmatprep.subr.mxu0 0.0
  %207 = vmatpush1.msra.mxu0 0.0
  %208 = vmatprep.subr.mxu0 0.0
  %209 = vmatpush1.msra.mxu0 0.0
  %210 = vmatprep.subr.mxu0 0.0
  %211 = vmatpush1.msra.mxu0 0.0
  %212 = vmatprep.subr.mxu0 0.0
  %213 = vmatpush1.msra.mxu0 0.0
  %214 = vmatprep.subr.mxu0 0.0
  %215 = vmatpush1.msra.mxu0 0.0
  %216 = vmatprep.subr.mxu0 0.0
  %217 = vmatpush1.msra.mxu0 0.0
  %218 = vmatprep.subr.mxu0 0.0
  %219 = vmatpush1.msra.mxu0 0.0
  %220 = vmatprep.subr.mxu0 0.0
  %221 = vmatpush1.msra.mxu0 0.0
  %222 = vmatprep.subr.mxu0 0.0
  %223 = vmatpush1.msra.mxu0 0.0
  %224 = vmatprep.subr.mxu0 0.0
  %225 = vmatpush1.msra.mxu0 0.0
  %226 = vmatprep.subr.mxu0 0.0
  %227 = vmatpush1.msra.mxu0 0.0
  %228 = vmatprep.subr.mxu0 0.0
  %229 = vmatpush1.msra.mxu0 0.0
  %230 = vmatprep.subr.mxu0 0.0
  %231 = vmatpush1.msra.mxu0 0.0
  %232 = vmatprep.subr.mxu0 0.0
  %233 = vmatpush1.msra.mxu0 0.0
  %234 = vmatprep.subr.mxu0 0.0
  %235 = vmatpush1.msra.mxu0 0.0
  %236 = vmatprep.subr.mxu0 0.0
  %237 = vmatpush1.msra.mxu0 0.0
  %238 = vmatprep.subr.mxu0 0.0
  %239 = vmatpush1.msra.mxu0 0.0
  %240 = vmatprep.subr.mxu0 0.0
  %241 = vmatpush1.msra.mxu0 0.0
  %242 = vmatprep.subr.mxu0 0.0
  %243 = vmatpush1.msra.mxu0 0.0
  %244 = vmatprep.mubr.f32.mxu0 0.0
  %245 = vmatmul.mubr.f32.gmra.mrb[0].mxu0 %v175
  %v246 = vpop.f32.mrb[0].mxu0
  %v247 = vadd.f32 %v172, %v246
  %v248 = vpop.f32.mrb[0].mxu0
  %249 = vmatprep.mubr.f32.mxu0 0.0
  %250 = vmatmul.mubr.f32.gmra.mrb[0].mxu0 %v178
  %v251 = vpop.f32.mrb[0].mxu0
  %v252 = vadd.f32 %v173, %v251
  %v253 = vpop.f32.mrb[0].mxu0
  %254 = vdwg.mxu0
  %255 = vset.pattern.permute.xlu0 3
  %256 = vperm.xlu0 %255, %v15
  %v257 = vpop.permute.xlu0 %256
  %259 = vset.pattern.permute.xlu0 3
  %260 = vperm.xlu0 %259, %v16
  %v261 = vpop.permute.xlu0 %260
  %v263 = vadd.f32 %v247, %v257
  %v264 = vadd.f32 %v252, %v261
  %v265 = vmax.f32 %v263, 0.0
  %v266 = vmax.f32 %v264, 0.0
  %s267 = scalar_lea.vmem %s1, 32
  %v268 = vld [vmem:[%s267] sm:$0xff]
  %v269 = vld [vmem:[%s267 + $0x8] sm:$0x1]
  %270 = vset.pattern.permute.xlu0 9
  %271 = vperm.xlu0 %270, %v15
  %v272 = vpop.permute.xlu0 %271
  %274 = vset.pattern.permute.xlu0 9
  %275 = vperm.xlu0 %274, %v16
  %v276 = vpop.permute.xlu0 %275
  %v278 = vlaneseq
  %v279 = vshrl.u32 %v278, 7
  %v280 = vsub.s32 0, %v279
  %v281 = vrot.slane %v266, %v280
  %v282 = vmul.f32 %v272, %v281
  %v283 = vmul.f32 %v276, %v281
  %v285 = vsel %vm63, %v268, 0
  %v288 = vsel %vm63, %v269, 0
  %290 = vmatprep.subr.mxu0 0.0
  %291 = vmatpush1.msra.mxu0 %v265
  %292 = vmatprep.subr.mxu0 0.0
  %293 = vmatpush1.msra.mxu0 0.0
  %294 = vmatprep.subr.mxu0 0.0
  %295 = vmatpush1.msra.mxu0 0.0
  %296 = vmatprep.subr.mxu0 0.0
  %297 = vmatpush1.msra.mxu0 0.0
  %298 = vmatprep.subr.mxu0 0.0
  %299 = vmatpush1.msra.mxu0 0.0
  %300 = vmatprep.subr.mxu0 0.0
  %301 = vmatpush1.msra.mxu0 0.0
  %302 = vmatprep.subr.mxu0 0.0
  %303 = vmatpush1.msra.mxu0 0.0
  %304 = vmatprep.subr.mxu0 0.0
  %305 = vmatpush1.msra.mxu0 0.0
  %306 = vmatprep.subr.mxu0 0.0
  %307 = vmatpush1.msra.mxu0 0.0
  %308 = vmatprep.subr.mxu0 0.0
  %309 = vmatpush1.msra.mxu0 0.0
  %310 = vmatprep.subr.mxu0 0.0
  %311 = vmatpush1.msra.mxu0 0.0
  %312 = vmatprep.subr.mxu0 0.0
  %313 = vmatpush1.msra.mxu0 0.0
  %314 = vmatprep.subr.mxu0 0.0
  %315 = vmatpush1.msra.mxu0 0.0
  %316 = vmatprep.subr.mxu0 0.0
  %317 = vmatpush1.msra.mxu0 0.0
  %318 = vmatprep.subr.mxu0 0.0
  %319 = vmatpush1.msra.mxu0 0.0
  %320 = vmatprep.subr.mxu0 0.0
  %321 = vmatpush1.msra.mxu0 0.0
  %322 = vmatprep.subr.mxu0 0.0
  %323 = vmatpush1.msra.mxu0 0.0
  %324 = vmatprep.subr.mxu0 0.0
  %325 = vmatpush1.msra.mxu0 0.0
  %326 = vmatprep.subr.mxu0 0.0
  %327 = vmatpush1.msra.mxu0 0.0
  %328 = vmatprep.subr.mxu0 0.0
  %329 = vmatpush1.msra.mxu0 0.0
  %330 = vmatprep.subr.mxu0 0.0
  %331 = vmatpush1.msra.mxu0 0.0
  %332 = vmatprep.subr.mxu0 0.0
  %333 = vmatpush1.msra.mxu0 0.0
  %334 = vmatprep.subr.mxu0 0.0
  %335 = vmatpush1.msra.mxu0 0.0
  %336 = vmatprep.subr.mxu0 0.0
  %337 = vmatpush1.msra.mxu0 0.0
  %338 = vmatprep.subr.mxu0 0.0
  %339 = vmatpush1.msra.mxu0 0.0
  %340 = vmatprep.subr.mxu0 0.0
  %341 = vmatpush1.msra.mxu0 0.0
  %342 = vmatprep.subr.mxu0 0.0
  %343 = vmatpush1.msra.mxu0 0.0
  %344 = vmatprep.subr.mxu0 0.0
  %345 = vmatpush1.msra.mxu0 0.0
  %346 = vmatprep.subr.mxu0 0.0
  %347 = vmatpush1.msra.mxu0 0.0
  %348 = vmatprep.subr.mxu0 0.0
  %349 = vmatpush1.msra.mxu0 0.0
  %350 = vmatprep.subr.mxu0 0.0
  %351 = vmatpush1.msra.mxu0 0.0
  %352 = vmatprep.subr.mxu0 0.0
  %353 = vmatpush1.msra.mxu0 0.0
  %354 = vmatprep.mubr.f32.mxu0 0.0
  %355 = vmatmul.mubr.f32.gmra.mrb[0].mxu0 %v285
  %v356 = vpop.f32.mrb[0].mxu0
  %v357 = vadd.f32 %v282, %v356
  %v358 = vpop.f32.mrb[0].mxu0
  %359 = vmatprep.mubr.f32.mxu0 0.0
  %360 = vmatmul.mubr.f32.gmra.mrb[0].mxu0 %v288
  %v361 = vpop.f32.mrb[0].mxu0
  %v362 = vadd.f32 %v283, %v361
  %v363 = vpop.f32.mrb[0].mxu0
  %364 = vdwg.mxu0
  %365 = vset.pattern.permute.xlu0 4
  %366 = vperm.xlu0 %365, %v15
  %v367 = vpop.permute.xlu0 %366
  %369 = vset.pattern.permute.xlu0 4
  %370 = vperm.xlu0 %369, %v16
  %v371 = vpop.permute.xlu0 %370
  %v373 = vadd.f32 %v357, %v367
  %v374 = vadd.f32 %v362, %v371
  %v375 = vmax.f32 %v373, 0.0
  %v376 = vmax.f32 %v374, 0.0
  %377 = vset.pattern.permute.xlu0 5
  %378 = vperm.xlu0 %377, %v15
  %v379 = vpop.permute.xlu0 %378
  %381 = vset.pattern.permute.xlu0 5
  %382 = vperm.xlu0 %381, %v16
  %v383 = vpop.permute.xlu0 %382
  %v385 = vmul.f32 %v379, %v375
  %v386 = vmul.f32 %v383, %v376
  %vm387 = vcmask 1040384
  %v388 = vsel %vm387, %v386, 0.0
  %v389 = vadd.f32 %v385, %v388
  %v390 = vrot.slane %v389, 4
  %v391 = vadd.f32 %v389, %v390
  %v392 = vrot.slane %v391, 2
  %v393 = vadd.f32 %v391, %v392
  %v394 = vrot.slane %v393, 1
  %v395 = vadd.f32 %v393, %v394
  %396 = vset.pattern.permute.xlu0 6
  %397 = vperm.xlu0 %396, %v15
  %v398 = vpop.permute.xlu0 %397
  %v400 = vadd.f32 %v395, %v398
  %401 = vst [vmem:[%s3] sm:$0x1] %v400
  // Predicated region
  $region14: #{net_forward.1} parent=0 // pred_check
    _
  $region15: #{net_forward.1} parent=0 // pred_check_branch
    %403 = sbr.rel (0) target = $region17
  $region16: #{net_forward.1} parent=0 // pred_region
    _
  $region17: #{net_forward.1} parent=0 // pred_fallthru
    _
  // Predicated region
  $region18: #{net_forward.1} parent=0 // pred_check
    _
  $region19: #{net_forward.1} parent=0 // pred_check_branch
    %405 = sbr.rel (0) target = $region21
  $region20: #{net_forward.1} parent=0 // pred_region
    _
  $region21: #{net_forward.1} parent=0 // pred_fallthru
    _

</llo_original>
